<compile_context>
chip_gen: v6e
topology: v6e:2x2x1
jax: 0.10.0
libtpu: 0.0.40
codegen_flags: <defaults>
</compile_context>

<pallas_src>
import functools

import jax
import jax.numpy as jnp
from jax.experimental import pallas as pl
from jax.experimental.pallas import tpu as pltpu


def _cdiv(a, b):
    return -(-a // b)


def _round_up(a, m):
    return _cdiv(a, m) * m


# ----------------------------------------------------------------------------
# Kernels
# ----------------------------------------------------------------------------

def highway_resident_kernel(x_ref, w_ref, b_ref, o_ref):
    # x_ref: (tm, wp) f32 input rows
    # w_ref: (L, wp, 2*wp) bf16 fused [gate | transfer] weights (all layers resident)
    # b_ref: (L, 1, 2*wp) f32 fused biases (gate bias already includes gate_bias)
    # o_ref: (tm, wp) output rows
    wp = x_ref.shape[-1]
    num_layers = w_ref.shape[0]

    val0 = x_ref[...].astype(jnp.float32)

    def body(l, val):
        # One fused bf16 matmul per layer, f32 accumulation.
        proj = jnp.dot(val.astype(jnp.bfloat16), w_ref[l],
                       preferred_element_type=jnp.float32) + b_ref[l]
        # sigmoid with the divide on the EUP slot.
        g = pl.reciprocal(1.0 + jnp.exp(-proj[:, :wp]), approx=True)
        t = jnp.maximum(proj[:, wp:], 0.0)          # transfer_class = ReLU
        return val + g * (t - val)                  # = g*t + (1-g)*val

    val = jax.lax.fori_loop(0, num_layers, body, val0)
    o_ref[...] = val.astype(o_ref.dtype)


def highway_streamed_kernel(x_ref, w_ref, b_ref, o_ref):
    # x_ref: (tm, wp) f32 input rows (only read on layer 0)
    # w_ref: (wp, 2*wp) bf16 fused weights for this layer (layer dim squeezed)
    # b_ref: (1, 2*wp)  f32 fused biases for this layer
    # o_ref: (tm, wp)   f32 output block; constant block index across the layer
    #                   axis -> acts as the resident accumulator (no scratch).
    wp = x_ref.shape[-1]
    layer = pl.program_id(1)

    @pl.when(layer == 0)
    def _():
        o_ref[...] = x_ref[...].astype(jnp.float32)

    val = o_ref[...]
    proj = jnp.dot(val.astype(jnp.bfloat16), w_ref[...],
                   preferred_element_type=jnp.float32) + b_ref[...]
    g = pl.reciprocal(1.0 + jnp.exp(-proj[:, :wp]), approx=True)
    t = jnp.maximum(proj[:, wp:], 0.0)
    o_ref[...] = val + g * (t - val)


# ----------------------------------------------------------------------------
# One-time parameter preparation (call at parameter-load time, NOT per forward)
# ----------------------------------------------------------------------------

def prepare_highway_params(wg, bg, wt, bt, *, gate_bias):
    """Fuse gate+transfer projections, pad the feature dim to a lane multiple
    and cast weights to bf16 -- once, at load time.

    wg/wt: (L, width, width) laid out (in, out)  [torch: linear.weight.T]
    bg/bt: (L, width) or (L, 1, width)
    Returns (w_fused bf16 (L, wp, 2*wp), b_fused f32 (L, 1, 2*wp), width).
    """
    L, width, width2 = wg.shape
    assert width == width2, "expected square (in, out) highway weights"
    assert wt.shape == wg.shape

    bg = bg.reshape(L, 1, width).astype(jnp.float32) + jnp.float32(gate_bias)
    bt = bt.reshape(L, 1, width).astype(jnp.float32)

    wp = _round_up(max(width, 128), 128)
    pad = wp - width
    if pad:
        wg = jnp.pad(wg, ((0, 0), (0, pad), (0, pad)))
        wt = jnp.pad(wt, ((0, 0), (0, pad), (0, pad)))
        bg = jnp.pad(bg, ((0, 0), (0, 0), (0, pad)))
        bt = jnp.pad(bt, ((0, 0), (0, 0), (0, pad)))

    w = jnp.concatenate([wg, wt], axis=-1).astype(jnp.bfloat16)   # (L, wp, 2*wp)
    b = jnp.concatenate([bg, bt], axis=-1).astype(jnp.float32)    # (L, 1, 2*wp)
    return w, b, width


# ----------------------------------------------------------------------------
# Forward wrapper
# ----------------------------------------------------------------------------

_VMEM_BUDGET = 44 << 20          # safe under v7x's 64 MiB physical VMEM
_VMEM_CAP = 48 << 20


def highway_forward(x, w_fused, b_fused, width, *, tm=512, out_dtype=None,
                    force_variant=None):
    """x: (N, width) f32.  w_fused/b_fused from prepare_highway_params."""
    N, width_in = x.shape
    assert width_in == width
    L, wp, two_wp = w_fused.shape
    assert two_wp == 2 * wp
    out_dtype = out_dtype or x.dtype

    # Pad feature dim of the activations (padded lanes stay exactly zero).
    if wp > width:
        x = jnp.pad(x, ((0, 0), (0, wp - width)))

    # Row tile: minimize row-padding waste ...
    nb = max(1, _cdiv(N, tm))
    tm_eff = min(tm, _round_up(_cdiv(N, nb), 8))
    # ... and guarantee >= 2 row blocks for megacore sharding on v7x.
    if _cdiv(N, tm_eff) == 1 and N >= 256:
        tm_eff = _round_up(_cdiv(N, 2), 8)

    # VMEM budgeting: pick the resident-weights variant when the whole fused
    # bf16 weight stack (double-buffered) + row tiles fit; otherwise stream
    # one layer at a time (and shrink the row tile if even that is too big).
    def _needs(tm_rows, resident):
        tile = tm_rows * wp * 4                  # f32 row tile (x / out)
        proj = tm_rows * 2 * wp * 4              # f32 projection temp
        if resident:
            wbytes = L * wp * 2 * wp * 2 + L * 2 * wp * 4
        else:
            wbytes = wp * 2 * wp * 2 + 2 * wp * 4
        return 2 * wbytes + 4 * tile + 2 * proj

    resident = _needs(tm_eff, True) <= _VMEM_BUDGET
    if force_variant == "resident":
        resident = True
    elif force_variant == "streamed":
        resident = False
    if not resident:
        while _needs(tm_eff, False) > _VMEM_BUDGET and tm_eff > 64:
            tm_eff = _round_up(tm_eff // 2, 8)

    Np = _round_up(N, tm_eff)
    if Np > N:
        x = jnp.pad(x, ((0, Np - N), (0, 0)))
    grid_rows = Np // tm_eff

    vmem_limit = int(min(max(_needs(tm_eff, resident) + (8 << 20), 16 << 20),
                         _VMEM_CAP))

    if resident:
        out = pl.pallas_call(
            highway_resident_kernel,
            out_shape=jax.ShapeDtypeStruct((Np, wp), out_dtype),
            grid_spec=pltpu.PrefetchScalarGridSpec(
                num_scalar_prefetch=0,
                grid=(grid_rows,),
                in_specs=[
                    pl.BlockSpec((tm_eff, wp), lambda i: (i, 0)),
                    # Full-extent, constant-index blocks: weights/biases stay
                    # resident in VMEM across all row blocks.
                    pl.BlockSpec((L, wp, 2 * wp), lambda i: (0, 0, 0)),
                    pl.BlockSpec((L, 1, 2 * wp), lambda i: (0, 0, 0)),
                ],
                out_specs=pl.BlockSpec((tm_eff, wp), lambda i: (i, 0)),
            ),
            compiler_params=pltpu.CompilerParams(
                dimension_semantics=("parallel",),
                vmem_limit_bytes=vmem_limit),
        )(x, w_fused, b_fused)
        return out[:N, :width]

    # Streamed path: layer axis is the inner "arbitrary" grid axis; the f32
    # output block is the resident accumulator (constant block index over l).
    out = pl.pallas_call(
        highway_streamed_kernel,
        out_shape=jax.ShapeDtypeStruct((Np, wp), jnp.float32),
        grid_spec=pltpu.PrefetchScalarGridSpec(
            num_scalar_prefetch=0,
            grid=(grid_rows, L),
            in_specs=[
                pl.BlockSpec((tm_eff, wp), lambda i, l: (i, 0)),
                pl.BlockSpec((pl.Squeezed(), wp, 2 * wp), lambda i, l: (l, 0, 0)),
                pl.BlockSpec((pl.Squeezed(), 1, 2 * wp), lambda i, l: (l, 0, 0)),
            ],
            out_specs=pl.BlockSpec((tm_eff, wp), lambda i, l: (i, 0)),
        ),
        compiler_params=pltpu.CompilerParams(
            dimension_semantics=("parallel", "arbitrary"),
            vmem_limit_bytes=vmem_limit),
    )(x, w_fused, b_fused)
    out = out[:N, :width]
    return out if out.dtype == out_dtype else out.astype(out_dtype)


# ----------------------------------------------------------------------------
# Pure-JAX reference (matches the torch module in eval mode)
# ----------------------------------------------------------------------------

def highway_reference(x, wg, bg, wt, bt, *, gate_bias):
    val = x.astype(jnp.float32)
    for i in range(wg.shape[0]):
        g_in = val @ wg[i] + bg[i]
        t_in = val @ wt[i] + bt[i]
        g = jax.nn.sigmoid(g_in + gate_bias)
        t = jnp.maximum(t_in, 0.0)
        val = g * t + (1.0 - g) * val
    return val.astype(x.dtype)


if __name__ == "__main__":
    num_layers = 2
    width = 32
    batch, seq = 2, 8
    N = batch * seq        # rows = batch * seq flattened
    gate_bias = -2.0       # module's `bias` scalar added to the gate logits
    # dropout = 0.1 -> identity at inference

    key = jax.random.PRNGKey(0)
    kx, kwg, kbg, kwt, kbt = jax.random.split(key, 5)

    bound = 1.0 / (width ** 0.5)   # torch nn.Linear default init range
    x = jax.random.normal(kx, (N, width), dtype=jnp.float32)
    wg = jax.random.uniform(kwg, (num_layers, width, width), jnp.float32, -bound, bound)
    bg = jax.random.uniform(kbg, (num_layers, 1, width), jnp.float32, -bound, bound)
    wt = jax.random.uniform(kwt, (num_layers, width, width), jnp.float32, -bound, bound)
    bt = jax.random.uniform(kbt, (num_layers, 1, width), jnp.float32, -bound, bound)

    # One-time parameter preparation (fuse / pad / bf16-cast) at load time.
    w_fused, b_fused, width = prepare_highway_params(wg, bg, wt, bt,
                                                     gate_bias=gate_bias)
    w_fused = jax.block_until_ready(w_fused)

    ref = highway_reference(x, wg, bg, wt, bt, gate_bias=gate_bias)

    # Resident-weights path (auto-selected for this size).
    out = highway_forward(x, w_fused, b_fused, width)
    out = jax.block_until_ready(out)
    assert out.shape == ref.shape, "shape mismatch vs reference"
    # bf16 matmul operands + approx reciprocal -> relaxed tolerance.
    assert jnp.allclose(out, ref, atol=3e-2, rtol=3e-2), "resident path mismatch"

    # Also exercise the streamed (per-layer weight DMA) path.
    out_s = highway_forward(x, w_fused, b_fused, width, force_variant="streamed")
    out_s = jax.block_until_ready(out_s)
    assert jnp.allclose(out_s, ref, atol=3e-2, rtol=3e-2), "streamed path mismatch"

    print("KERNEL_OK")
</pallas_src>

<mosaic_0001>
module attributes {stable_mosaic.version = 11 : i64} {
  func.func @highway_resident_kernel(%arg0: i32, %arg1: memref<16x128xf32, #tpu.memory_space<vmem>>, %arg2: memref<2x128x256xbf16, #tpu.memory_space<vmem>>, %arg3: memref<2x1x256xf32, #tpu.memory_space<vmem>>, %arg4: memref<16x128xf32, #tpu.memory_space<vmem>>) attributes {dimension_semantics = [#tpu.dimension_semantics<parallel>], iteration_bounds = array<i64: 1>, scalar_prefetch = 0 : i64, scratch_operands = 0 : i64, tpu.core_type = #tpu.core_type<tc>, window_params = [{transform_indices = @transform_0, window_bounds = array<i64: 16, 128>}, {pipeline_mode = #tpu.pipeline_mode<synchronous>, transform_indices = @transform_1, window_bounds = array<i64: 2, 128, 256>}, {pipeline_mode = #tpu.pipeline_mode<synchronous>, transform_indices = @transform_2, window_bounds = array<i64: 2, 1, 256>}, {transform_indices = @transform_3, window_bounds = array<i64: 16, 128>}]} {
    %c0 = arith.constant 0 : index
    %c0_0 = arith.constant 0 : index
    %0 = vector.load %arg1[%c0, %c0_0] : memref<16x128xf32, #tpu.memory_space<vmem>>, vector<16x128xf32>
    %c0_i32 = arith.constant 0 : i32
    %c2_i32 = arith.constant 2 : i32
    %1 = arith.addi %c0_i32, %c2_i32 : i32
    %c1_i32 = arith.constant 1 : i32
    %2 = scf.for %arg5 = %c0_i32 to %1 step %c1_i32 iter_args(%arg6 = %0) -> (vector<16x128xf32>)  : i32 {
      %4 = arith.truncf %arg6 : vector<16x128xf32> to vector<16x128xbf16>
      %5 = arith.index_cast %arg5 : i32 to index
      %c0_4 = arith.constant 0 : index
      %c0_5 = arith.constant 0 : index
      %6 = vector.load %arg2[%5, %c0_4, %c0_5] : memref<2x128x256xbf16, #tpu.memory_space<vmem>>, vector<1x128x256xbf16>
      %7 = vector.shape_cast %6 : vector<1x128x256xbf16> to vector<128x256xbf16>
      %cst = arith.constant dense<0.000000e+00> : vector<16x256xf32>
      %8 = tpu.matmul %4, %7, %cst {dimension_numbers = #tpu.dot_dimension_numbers<[1], [0], [0], [1], [0, 0, 1, 1], [], []>} : vector<16x128xbf16>, vector<128x256xbf16>, vector<16x256xf32> -> vector<16x256xf32>
      %9 = arith.index_cast %arg5 : i32 to index
      %c0_6 = arith.constant 0 : index
      %c0_7 = arith.constant 0 : index
      %10 = vector.load %arg3[%9, %c0_6, %c0_7] : memref<2x1x256xf32, #tpu.memory_space<vmem>>, vector<1x1x256xf32>
      %11 = vector.shape_cast %10 : vector<1x1x256xf32> to vector<1x256xf32>
      %12 = vector.broadcast %11 : vector<1x256xf32> to vector<16x256xf32>
      %13 = arith.addf %8, %12 : vector<16x256xf32>
      %14 = vector.extract_strided_slice %13 {offsets = [0, 0], sizes = [16, 128], strides = [1, 1]} : vector<16x256xf32> to vector<16x128xf32>
      %cst_8 = arith.constant 0.000000e+00 : f32
      %15 = vector.broadcast %cst_8 : f32 to vector<16x128xf32>
      %16 = arith.subf %15, %14 : vector<16x128xf32>
      %17 = math.exp %16 : vector<16x128xf32>
      %cst_9 = arith.constant 1.000000e+00 : f32
      %18 = vector.broadcast %cst_9 : f32 to vector<16x128xf32>
      %19 = arith.addf %18, %17 : vector<16x128xf32>
      %20 = tpu.reciprocal %19 {approx = true} : vector<16x128xf32> -> vector<16x128xf32>
      %21 = vector.extract_strided_slice %13 {offsets = [0, 128], sizes = [16, 128], strides = [1, 1]} : vector<16x256xf32> to vector<16x128xf32>
      %cst_10 = arith.constant 0.000000e+00 : f32
      %22 = vector.broadcast %cst_10 : f32 to vector<16x128xf32>
      %23 = arith.maximumf %21, %22 : vector<16x128xf32>
      %24 = arith.subf %23, %arg6 : vector<16x128xf32>
      %25 = arith.mulf %20, %24 : vector<16x128xf32>
      %26 = arith.addf %arg6, %25 : vector<16x128xf32>
      scf.yield %26 : vector<16x128xf32>
    }
    %c2_i32_1 = arith.constant 2 : i32
    %c0_2 = arith.constant 0 : index
    %c0_3 = arith.constant 0 : index
    %3 = vector.load %arg4[%c0_2, %c0_3] : memref<16x128xf32, #tpu.memory_space<vmem>>, vector<16x128xf32>
    tpu.vector_store %arg4[%c0_2, %c0_3], %2 {strides = array<i32>} : memref<16x128xf32, #tpu.memory_space<vmem>>, vector<16x128xf32>,
    return
  }
  func.func @transform_0(%arg0: i32) -> (i32, i32) {
    %c0_i32 = arith.constant 0 : i32
    %c0_i32_0 = arith.constant 0 : i32
    return %arg0, %c0_i32 : i32, i32
  }
  func.func @transform_1(%arg0: i32) -> (i32, i32, i32) {
    %c0_i32 = arith.constant 0 : i32
    %c0_i32_0 = arith.constant 0 : i32
    %c0_i32_1 = arith.constant 0 : i32
    %c0_i32_2 = arith.constant 0 : i32
    return %c0_i32, %c0_i32_0, %c0_i32_1 : i32, i32, i32
  }
  func.func @transform_2(%arg0: i32) -> (i32, i32, i32) {
    %c0_i32 = arith.constant 0 : i32
    %c0_i32_0 = arith.constant 0 : i32
    %c0_i32_1 = arith.constant 0 : i32
    %c0_i32_2 = arith.constant 0 : i32
    return %c0_i32, %c0_i32_0, %c0_i32_1 : i32, i32, i32
  }
  func.func @transform_3(%arg0: i32) -> (i32, i32) {
    %c0_i32 = arith.constant 0 : i32
    %c0_i32_0 = arith.constant 0 : i32
    return %arg0, %c0_i32 : i32, i32
  }
}

</mosaic_0001>

<llo_original>
// kernel: tpu_custom_call.1
$region0: #{tpu_custom_call.1}
  #allocation0 [shape = 'u32[]', space=smem, size = 0x4, offset = 0x4, fixed_abs, tag = 'smem constant byte address 0x4 - core index']
  #allocation1 [shape = 'u32[144,128]{1,0:T(1,128)}', space=vmem, size = 0x12000, scoped, tag = 'internal scratch']
  %s0 = inlined_call_operand.hbm [shape: f32[16,128], index: 0, kind: input, shape index: {}]
  %s1 = inlined_call_operand.hbm [shape: bf16[2,128,256], index: 1, kind: input, shape index: {}]
  %s2 = inlined_call_operand.hbm [shape: f32[2,1,256], index: 2, kind: input, shape index: {}]
  %s3 = inlined_call_operand.hbm [shape: f32[16,128], index: 3, kind: output, shape index: {}]
  %s4 = sld [smem:[#allocation0]]
  $region41: #{tpu_custom_call.1} parent=0
    _
  %s6 = ssub.s32 1, %s4
  %s7 = scalar_select 0, %s6, %s4
  $region1: #{tpu_custom_call.1} parent=0
    #allocation2 [shape = 'u8[8192]{0}', space=vmem, size = 0x2000, scoped, tag = 'input window, operand 0, single buffered']
    #allocation3 [shape = 's32[1]{0}', space=sflag, size = 0x4, scoped, tag = 'scoped memory for tpu_custom_call.1']
    #allocation4 [shape = 's32[1]{0}', space=sflag, size = 0x4, scoped, tag = 'scoped memory for tpu_custom_call.1']
    #allocation5 [shape = 'u8[131072]{0}', space=vmem, size = 0x20000, scoped, tag = 'input window, operand 1, single buffered']
    #allocation6 [shape = 's32[1]{0}', space=sflag, size = 0x4, scoped, tag = 'scoped memory for tpu_custom_call.1']
    #allocation7 [shape = 'u8[2048]{0}', space=vmem, size = 0x800, scoped, tag = 'input window, operand 2, single buffered']
    #allocation8 [shape = 'u8[8192]{0}', space=vmem, size = 0x2000, scoped, tag = 'output window, operand 0, single buffered']
    %8 = vsyncpa [#allocation3], 0
    %9 = vsyncpa [#allocation6], 0
    %10 = vsyncpa [#allocation4], 0
    // Predicated region
    $region2: #{tpu_custom_call.1} parent=1 // pred_check
      _
    $region3: #{tpu_custom_call.1} parent=1 // pred_check_branch
      %12 = sbr.rel (0) target = $region5
    $region4: #{tpu_custom_call.1} parent=1 // pred_region
      %s14 = ssub.s32 256, 256
      %15 = vsyncadd [#allocation3], %s14
      %s16 = sshll.u32 [#allocation2], 4
      %s17 = int_to_ptr.vmem [resolvable:$true] %s16
      %22 = dma.hbm_to_vmem [thread:$0]  %s0, 256, %s17, [#allocation3], 128, 128, 8
    $region5: #{tpu_custom_call.1} parent=1 // pred_fallthru
      _
    // Predicated region
    $region6: #{tpu_custom_call.1} parent=1 // pred_check
      _
    $region7: #{tpu_custom_call.1} parent=1 // pred_check_branch
      %24 = sbr.rel (0) target = $region9
    $region8: #{tpu_custom_call.1} parent=1 // pred_region
      %s26 = ssub.s32 4096, 4096
      %27 = vsyncadd [#allocation6], %s26
      %s28 = sshll.u32 [#allocation5], 4
      %s29 = int_to_ptr.vmem [resolvable:$true] %s28
      %34 = dma.hbm_to_vmem [thread:$0]  %s1, 4096, %s29, [#allocation6], 128, 128, 8
    $region9: #{tpu_custom_call.1} parent=1 // pred_fallthru
      _
    // Predicated region
    $region10: #{tpu_custom_call.1} parent=1 // pred_check
      _
    $region11: #{tpu_custom_call.1} parent=1 // pred_check_branch
      %36 = sbr.rel (0) target = $region13
    $region12: #{tpu_custom_call.1} parent=1 // pred_region
      %s38 = ssub.s32 64, 64
      %39 = vsyncadd [#allocation6], %s38
      %s40 = sshll.u32 [#allocation7], 4
      %s41 = int_to_ptr.vmem [resolvable:$true] %s40
      %46 = dma.hbm_to_vmem [thread:$0]  %s2, 64, %s41, [#allocation6], 32, 32, 2
    $region13: #{tpu_custom_call.1} parent=1 // pred_fallthru
      _
    // Predicated region
    $region14: #{tpu_custom_call.1} parent=1 // pred_check
      _
    $region15: #{tpu_custom_call.1} parent=1 // pred_check_branch
      %48 = sbr.rel (0) target = $region17
    $region16: #{tpu_custom_call.1} parent=1 // pred_region
      %49 = dma.done [#allocation3], 256
    $region17: #{tpu_custom_call.1} parent=1 // pred_fallthru
      _
    // Predicated region
    $region18: #{tpu_custom_call.1} parent=1 // pred_check
      _
    $region19: #{tpu_custom_call.1} parent=1 // pred_check_branch
      %51 = sbr.rel (0) target = $region21
    $region20: #{tpu_custom_call.1} parent=1 // pred_region
      %52 = dma.done [#allocation6], 4096
    $region21: #{tpu_custom_call.1} parent=1 // pred_fallthru
      _
    // Predicated region
    $region22: #{tpu_custom_call.1} parent=1 // pred_check
      _
    $region23: #{tpu_custom_call.1} parent=1 // pred_check_branch
      %54 = sbr.rel (0) target = $region25
    $region24: #{tpu_custom_call.1} parent=1 // pred_region
      %55 = dma.done [#allocation6], 64
    $region25: #{tpu_custom_call.1} parent=1 // pred_fallthru
      _
    %v57 = vld [vmem:[#allocation2] sm:$0xff]
    %v58 = vld [vmem:[#allocation2 + $0x8] sm:$0xff]
    loop: start=0, step=1, limit=2
    $region26: #{tpu_custom_call.1} parent=1 // loop_pre_header
      _
    $region27: #{tpu_custom_call.1} parent=1 // loop_header
      %s60 = sphi 0, %s64
      %p61 = scmp.ge.s32.totalorder %s60, 2
      %v65 = vphi %v57, %v240
      %v66 = vphi %v58, %v241
    $region28: #{tpu_custom_call.1} parent=1 // loop_header_branch
      %63 = sbr.rel (%p61) target = $region32
    $region29: #{tpu_custom_call.1} parent=1 // loop_body
      %v67 = vpack.c.bf16 %v66, %v65
      %s68 = smul.u32 %s60, 32
      %s69 = smul.addr %s68, 4
      %s70 = scalar_lea.vmem [#allocation5], %s69
      %v71 = vld [vmem:[%s70] sm:$0xff]
      %v72 = vld [vmem:[%s70 + $0x8] sm:$0xff]
      %v73 = vld [vmem:[%s70 + $0x10] sm:$0xff]
      %v74 = vld [vmem:[%s70 + $0x18] sm:$0xff]
      %v75 = vld [vmem:[%s70 + $0x20] sm:$0xff]
      %v76 = vld [vmem:[%s70 + $0x28] sm:$0xff]
      %v77 = vld [vmem:[%s70 + $0x30] sm:$0xff]
      %v78 = vld [vmem:[%s70 + $0x38] sm:$0xff]
      %v79 = vld [vmem:[%s70 + $0x40] sm:$0xff]
      %v80 = vld [vmem:[%s70 + $0x48] sm:$0xff]
      %v81 = vld [vmem:[%s70 + $0x50] sm:$0xff]
      %v82 = vld [vmem:[%s70 + $0x58] sm:$0xff]
      %v83 = vld [vmem:[%s70 + $0x60] sm:$0xff]
      %v84 = vld [vmem:[%s70 + $0x68] sm:$0xff]
      %v85 = vld [vmem:[%s70 + $0x70] sm:$0xff]
      %v86 = vld [vmem:[%s70 + $0x78] sm:$0xff]
      %s87 = smul.u32 %s60, 2
      %s88 = scalar_lea.vmem [#allocation7], %s87
      %v89 = vld [vmem:[%s88] sm:$0x3]
      %v91 = vlaneseq
      %v92 = vshrl.u32 %v91, 7
      %v93 = vsub.s32 0, %v92
      %v94 = vrot.slane %v89, %v93
      %v95 = vlaneseq
      %v96 = vshrl.u32 %v95, 7
      %v97 = vsub.s32 1, %v96
      %v98 = vrot.slane %v89, %v97
      %v117 = vunpack.c.l.b16 %v71
      %v118 = vunpack.c.h.b16 %v71
      %v119 = vunpack.c.l.b16 %v72
      %v120 = vunpack.c.h.b16 %v72
      %v121 = vunpack.c.l.b16 %v73
      %v122 = vunpack.c.h.b16 %v73
      %v123 = vunpack.c.l.b16 %v74
      %v124 = vunpack.c.h.b16 %v74
      %v125 = vunpack.c.l.b16 %v75
      %v126 = vunpack.c.h.b16 %v75
      %v127 = vunpack.c.l.b16 %v76
      %v128 = vunpack.c.h.b16 %v76
      %v129 = vunpack.c.l.b16 %v77
      %v130 = vunpack.c.h.b16 %v77
      %v131 = vunpack.c.l.b16 %v78
      %v132 = vunpack.c.h.b16 %v78
      %v133 = vunpack.c.l.b16 %v79
      %v134 = vunpack.c.h.b16 %v79
      %v135 = vunpack.c.l.b16 %v80
      %v136 = vunpack.c.h.b16 %v80
      %v137 = vunpack.c.l.b16 %v81
      %v138 = vunpack.c.h.b16 %v81
      %v139 = vunpack.c.l.b16 %v82
      %v140 = vunpack.c.h.b16 %v82
      %v141 = vunpack.c.l.b16 %v83
      %v142 = vunpack.c.h.b16 %v83
      %v143 = vunpack.c.l.b16 %v84
      %v144 = vunpack.c.h.b16 %v84
      %v145 = vunpack.c.l.b16 %v85
      %v146 = vunpack.c.h.b16 %v85
      %v147 = vunpack.c.l.b16 %v86
      %v148 = vunpack.c.h.b16 %v86
      %v149 = vpack.c.b16 %v119, %v117
      %v150 = vpack.c.b16 %v120, %v118
      %v151 = vpack.c.b16 %v123, %v121
      %v152 = vpack.c.b16 %v124, %v122
      %v153 = vpack.c.b16 %v127, %v125
      %v154 = vpack.c.b16 %v128, %v126
      %v155 = vpack.c.b16 %v131, %v129
      %v156 = vpack.c.b16 %v132, %v130
      %v157 = vpack.c.b16 %v135, %v133
      %v158 = vpack.c.b16 %v136, %v134
      %v159 = vpack.c.b16 %v139, %v137
      %v160 = vpack.c.b16 %v140, %v138
      %v161 = vpack.c.b16 %v143, %v141
      %v162 = vpack.c.b16 %v144, %v142
      %v163 = vpack.c.b16 %v147, %v145
      %v164 = vpack.c.b16 %v148, %v146
      %181 = vmatprep.subr.bf16.mxu0 %v164
      %182 = vmatpush1.bf16.msra.mxu0 %v163
      %183 = vmatprep.subr.bf16.mxu0 %v162
      %184 = vmatpush1.bf16.msra.mxu0 %v161
      %185 = vmatprep.subr.bf16.mxu0 %v160
      %186 = vmatpush1.bf16.msra.mxu0 %v159
      %187 = vmatprep.subr.bf16.mxu0 %v158
      %188 = vmatpush1.bf16.msra.mxu0 %v157
      %189 = vmatprep.subr.bf16.mxu0 %v156
      %190 = vmatpush1.bf16.msra.mxu0 %v155
      %191 = vmatprep.subr.bf16.mxu0 %v154
      %192 = vmatpush1.bf16.msra.mxu0 %v153
      %193 = vmatprep.subr.bf16.mxu0 %v152
      %194 = vmatpush1.bf16.msra.mxu0 %v151
      %195 = vmatprep.subr.bf16.mxu0 %v150
      %196 = vmatpush1.bf16.msra.mxu0 %v149
      %197 = vmatprep.subr.bf16.mxu0 0
      %198 = vmatpush2.bf16.msra.mxu0 0
      %199 = vmatprep.subr.bf16.mxu0 0
      %200 = vmatpush2.bf16.msra.mxu0 0
      %201 = vmatprep.subr.bf16.mxu0 0
      %202 = vmatpush2.bf16.msra.mxu0 0
      %203 = vmatprep.subr.bf16.mxu0 0
      %204 = vmatpush2.bf16.msra.mxu0 0
      %205 = vmatprep.subr.bf16.mxu0 0
      %206 = vmatpush2.bf16.msra.mxu0 0
      %207 = vmatprep.subr.bf16.mxu0 0
      %208 = vmatpush2.bf16.msra.mxu0 0
      %209 = vmatprep.subr.bf16.mxu0 0
      %210 = vmatpush2.bf16.msra.mxu0 0
      %211 = vmatprep.subr.bf16.mxu0 0
      %212 = vmatpush2.bf16.msra.mxu0 0
      %213 = vmatprep.mubr.bf16.mxu0 0
      %214 = vmatmul.mubr.bf16.gmra.mxu0 %v67
      %v215 = vpop.f32.mrf.mxu0
      %v216 = vadd.f32 %v94, %v215
      %v217 = vpop.f32.mrf.mxu0
      %v218 = vadd.f32 %v98, %v217
      %v219 = vpop.f32.mrf.mxu0
      %v220 = vadd.f32 %v94, %v219
      %v221 = vpop.f32.mrf.mxu0
      %v222 = vadd.f32 %v98, %v221
      %223 = vdwg.mxu0
      %v224 = vsub.f32 0.0, %v216
      %v225 = vsub.f32 0.0, %v220
      %v226 = vmul.f32 %v224, 1.442695
      %v227 = vpow.pop %v226
      %v228 = vmul.f32 %v225, 1.442695
      %v229 = vpow.pop %v228
      %v230 = vadd.f32 %v227, 1.0
      %v231 = vadd.f32 %v229, 1.0
      %v232 = vrcp.pop %v230
      %v233 = vrcp.pop %v231
      %v234 = vmax.f32 %v218, 0.0
      %v235 = vmax.f32 %v222, 0.0
      %v236 = vsub.f32 %v234, %v65
      %v237 = vsub.f32 %v235, %v66
      %v238 = vmul.f32 %v232, %v236
      %v239 = vmul.f32 %v233, %v237
      %v240 = vadd.f32 %v65, %v238
      %v241 = vadd.f32 %v66, %v239
    $region30: #{tpu_custom_call.1} parent=1 // loop_footer
      %s64 = sadd.s32 1, %s60
    $region31: #{tpu_custom_call.1} parent=1 // loop_footer_branch
      %59 = sbr.rel target = $region27
    $region32: #{tpu_custom_call.1} parent=1 // loop_exit
      _
    %242 = vst [vmem:[#allocation8] sm:$0xff] %v65
    %243 = vst [vmem:[#allocation8 + $0x8] sm:$0xff] %v66
    // Predicated region
    $region33: #{tpu_custom_call.1} parent=1 // pred_check
      _
    $region34: #{tpu_custom_call.1} parent=1 // pred_check_branch
      %245 = sbr.rel (0) target = $region36
    $region35: #{tpu_custom_call.1} parent=1 // pred_region
      %s247 = ssub.s32 256, 256
      %248 = vsyncadd [#allocation4], %s247
      %s249 = sshll.u32 [#allocation8], 4
      %s250 = int_to_ptr.vmem [resolvable:$true] %s249
      %255 = dma.vmem_to_hbm [thread:$0]  %s250, 256, %s3, [#allocation4], 128, 128, 8
    $region36: #{tpu_custom_call.1} parent=1 // pred_fallthru
      _
    // Predicated region
    $region37: #{tpu_custom_call.1} parent=1 // pred_check
      _
    $region38: #{tpu_custom_call.1} parent=1 // pred_check_branch
      %257 = sbr.rel (0) target = $region40
    $region39: #{tpu_custom_call.1} parent=1 // pred_region
      %258 = dma.done [#allocation4], 256
    $region40: #{tpu_custom_call.1} parent=1 // pred_fallthru
      _
    %259 = vsyncpa [#allocation3], 1
    %260 = vsyncpa [#allocation6], 1
    %261 = vsyncpa [#allocation4], 1

</llo_original>
